<compile_context>
chip_gen: v5e
topology: v5e:2x2
jax: 0.10.0
libtpu: 0.0.40
codegen_flags: <defaults>
</compile_context>

<pallas_src>
import jax
import jax.numpy as jnp
from jax import lax
from jax.experimental import pallas as pl
from jax.experimental.pallas import tpu as pltpu

LANES = 128
SUBLANES = 8
CHUNK = 512          # rows per in-tile compute chunk (256 KiB f32 temporaries)
MAX_TM = 4096        # rows per DMA tile: 2 MiB f32 per input, 8 MiB double-buffered
NCORES = 2           # rows split across 2 TensorCores on v7x; serial loop on 1-TC chips


def _round_up(x, m):
    return (x + m - 1) // m * m


def dice_loss(outputs, targets, smooth=1.0):
    """Forward-only DiceLoss. outputs/targets: same shape, any numeric dtype."""
    assert outputs.shape == targets.shape
    n = outputs.size

    # Flatten (free reshape). Pad only the ragged sub-(8,128) tail, if any.
    o_flat = outputs.reshape(-1)
    t_flat = targets.reshape(-1)
    n_padded = _round_up(n, SUBLANES * LANES)
    if n_padded != n:
        # TODO(synk): this branch costs one extra HBM pass; only taken when
        # numel % 1024 != 0 (rare for NCHW tensors). Pad value 0 is neutral.
        o_flat = jnp.pad(o_flat, (0, n_padded - n))
        t_flat = jnp.pad(t_flat, (0, n_padded - n))
    rows = n_padded // LANES                           # multiple of 8 (static)

    o2d = o_flat.reshape(rows, LANES)
    t2d = t_flat.reshape(rows, LANES)

    # --- Tile / grid selection (all static Python ints). ---
    target_rows = pl.cdiv(rows, NCORES)
    if target_rows >= MAX_TM:
        tm = MAX_TM
    elif target_rows >= CHUNK:
        tm = _round_up(target_rows, CHUNK)
    else:
        tm = _round_up(target_rows, 32)                # legal tile for f32/bf16/i8/bool
        if tm >= rows:
            tm = rows                                  # full-extent block (always legal)
    chunk = CHUNK if tm % CHUNK == 0 else tm           # chunk divides tm, multiple of 8
    n_chunks = tm // chunk

    tiles_total = pl.cdiv(rows, tm)
    ncores = min(NCORES, tiles_total)
    tiles_per_core = pl.cdiv(tiles_total, ncores)

    def kernel(o_ref, t_ref, inter_ref, union_ref):
        c = pl.program_id(0)
        i = pl.program_id(1)

        @pl.when(i == 0)
        def _():
            inter_ref[...] = jnp.zeros_like(inter_ref)
            union_ref[...] = jnp.zeros_like(union_ref)

        # Nominal (unclamped) global start row of this tile; rows >= `rows`
        # are garbage (partial last block / clamped duplicate tile) -> masked.
        row0 = (c * tiles_per_core + i) * tm

        # Hoisted out of the chunk loop (broadcasts are not CSE'd by JAX).
        row_iota = lax.broadcasted_iota(jnp.int32, (chunk, LANES), 0)

        def body(ci, carry):
            inter_acc, union_acc = carry
            start = pl.multiple_of(ci * chunk, chunk)
            o = o_ref[pl.ds(start, chunk), :]                    # native dtype
            t = t_ref[pl.ds(start, chunk), :].astype(jnp.float32)
            valid = (row0 + ci * chunk + row_iota) < rows
            pos = jnp.logical_and(o > 0, valid)    # sigmoid(x) > 0.5  <=>  x > 0
            pred = pos.astype(jnp.float32)
            inter = jnp.where(pos, t, 0.0)         # == pred * t
            union = jnp.where(valid, pred + t, 0.0)
            # Fold rows into (8,128) vreg-shaped partials: pure VPU adds.
            inter_acc = inter_acc + jnp.sum(
                inter.reshape(chunk // SUBLANES, SUBLANES, LANES), axis=0)
            union_acc = union_acc + jnp.sum(
                union.reshape(chunk // SUBLANES, SUBLANES, LANES), axis=0)
            return inter_acc, union_acc

        zeros = jnp.zeros((SUBLANES, LANES), jnp.float32)
        inter_tile, union_tile = lax.fori_loop(0, n_chunks, body, (zeros, zeros),
                                               unroll=True)
        inter_ref[...] += inter_tile[None]
        union_ref[...] += union_tile[None]

    def in_map(c, i):
        # Clamp so a (possible) fully out-of-range tile of the 2-core split
        # re-reads the last real tile; the kernel's row mask zeroes it out.
        return (jnp.minimum(c * tiles_per_core + i, tiles_total - 1), 0)

    out_map = lambda c, i: (c, 0, 0)

    cost = pl.CostEstimate(
        flops=6 * rows * LANES,
        transcendentals=0,
        bytes_accessed=rows * LANES * (o2d.dtype.itemsize + t2d.dtype.itemsize)
        + 2 * ncores * SUBLANES * LANES * 4,
    )

    inter_p, union_p = pl.pallas_call(
        kernel,
        out_shape=(
            jax.ShapeDtypeStruct((ncores, SUBLANES, LANES), jnp.float32),
            jax.ShapeDtypeStruct((ncores, SUBLANES, LANES), jnp.float32),
        ),
        grid_spec=pltpu.PrefetchScalarGridSpec(
            num_scalar_prefetch=0,
            grid=(ncores, tiles_per_core),
            in_specs=[
                pl.BlockSpec((tm, LANES), in_map),
                pl.BlockSpec((tm, LANES), in_map),
            ],
            out_specs=[
                pl.BlockSpec((1, SUBLANES, LANES), out_map),
                pl.BlockSpec((1, SUBLANES, LANES), out_map),
            ],
        ),
        compiler_params=pltpu.CompilerParams(
            dimension_semantics=("parallel", "arbitrary")),
        cost_estimate=cost,
    )(o2d, t2d)

    # Tiny final combine (2 * ncores * 8 * 128 elements) in plain JAX.
    inter = jnp.sum(inter_p)
    union = jnp.sum(union_p)
    dice = 2.0 * (inter + smooth) / (union + smooth)
    return 1.0 - dice


def dice_loss_ref(outputs, targets, smooth=1.0):
    pred = (jax.nn.sigmoid(outputs.astype(jnp.float32)) > 0.5).astype(jnp.float32)
    t = targets.astype(jnp.float32)
    inter = jnp.sum(pred * t)
    union = jnp.sum(pred) + jnp.sum(t)
    dice = 2.0 * (inter + smooth) / (union + smooth)
    return 1.0 - dice


if __name__ == "__main__":
    key = jax.random.PRNGKey(0)
    k1, k2 = jax.random.split(key)
    # NCHW logits and binary targets, matching a segmentation-style use.
    B, C, H, W = 2, 4, 16, 16
    outputs = jax.random.normal(k1, (B, C, H, W), dtype=jnp.float32)
    targets = (jax.random.uniform(k2, (B, C, H, W)) > 0.5).astype(jnp.float32)

    loss = jax.block_until_ready(dice_loss(outputs, targets, smooth=1.0))
    ref = jax.block_until_ready(dice_loss_ref(outputs, targets, smooth=1.0))

    assert jnp.allclose(loss, ref, atol=1e-6, rtol=1e-6), (loss, ref)
    print("KERNEL_OK")
</pallas_src>

<mosaic_0001>
module attributes {stable_mosaic.version = 11 : i64} {
  func.func @kernel(%arg0: i32, %arg1: i32, %arg2: memref<16x128xf32, #tpu.memory_space<vmem>>, %arg3: memref<16x128xf32, #tpu.memory_space<vmem>>, %arg4: memref<1x8x128xf32, #tpu.memory_space<vmem>>, %arg5: memref<1x8x128xf32, #tpu.memory_space<vmem>>) attributes {dimension_semantics = [#tpu.dimension_semantics<parallel>, #tpu.dimension_semantics<arbitrary>], iteration_bounds = array<i64: 1, 1>, scalar_prefetch = 0 : i64, scratch_operands = 0 : i64, tpu.core_type = #tpu.core_type<tc>, window_params = [{transform_indices = @transform_0, window_bounds = array<i64: 16, 128>}, {transform_indices = @transform_1, window_bounds = array<i64: 16, 128>}, {transform_indices = @transform_2, window_bounds = array<i64: 1, 8, 128>}, {transform_indices = @transform_3, window_bounds = array<i64: 1, 8, 128>}]} {
    %c0_i32 = arith.constant 0 : i32
    %0 = arith.cmpi eq, %arg1, %c0_i32 : i32
    %1 = arith.extui %0 : i1 to i32
    %c0_i32_0 = arith.constant 0 : i32
    %2 = arith.cmpi ne, %1, %c0_i32_0 : i32
    scf.if %2 {
      %cst_24 = arith.constant 0.000000e+00 : f32
      %44 = vector.broadcast %cst_24 : f32 to vector<1x8x128xf32>
      %c0_25 = arith.constant 0 : index
      %c0_26 = arith.constant 0 : index
      %c0_27 = arith.constant 0 : index
      %45 = vector.load %arg4[%c0_25, %c0_26, %c0_27] : memref<1x8x128xf32, #tpu.memory_space<vmem>>, vector<1x8x128xf32>
      tpu.vector_store %arg4[%c0_25, %c0_26, %c0_27], %44 {strides = array<i32>} : memref<1x8x128xf32, #tpu.memory_space<vmem>>, vector<1x8x128xf32>,
      %cst_28 = arith.constant 0.000000e+00 : f32
      %46 = vector.broadcast %cst_28 : f32 to vector<1x8x128xf32>
      %c0_29 = arith.constant 0 : index
      %c0_30 = arith.constant 0 : index
      %c0_31 = arith.constant 0 : index
      %47 = vector.load %arg5[%c0_29, %c0_30, %c0_31] : memref<1x8x128xf32, #tpu.memory_space<vmem>>, vector<1x8x128xf32>
      tpu.vector_store %arg5[%c0_29, %c0_30, %c0_31], %46 {strides = array<i32>} : memref<1x8x128xf32, #tpu.memory_space<vmem>>, vector<1x8x128xf32>,
    } else {
    }
    %c1_i32 = arith.constant 1 : i32
    %3 = arith.muli %arg0, %c1_i32 : i32
    %4 = arith.addi %3, %arg1 : i32
    %c16_i32 = arith.constant 16 : i32
    %5 = arith.muli %4, %c16_i32 : i32
    %6 = tpu.iota {dimensions = array<i32: 0>} : vector<16x128xi32>
    %cst = arith.constant 0.000000e+00 : f32
    %7 = vector.broadcast %cst : f32 to vector<8x128xf32>
    %c0_i32_1 = arith.constant 0 : i32
    %c16_i32_2 = arith.constant 16 : i32
    %8 = arith.muli %c0_i32_1, %c16_i32_2 : i32
    %9 = tpu.assume_multiple %8, 16 : i32
    %10 = arith.index_cast %9 : i32 to index
    %c0 = arith.constant 0 : index
    %11 = vector.load %arg2[%10, %c0] : memref<16x128xf32, #tpu.memory_space<vmem>>, vector<16x128xf32>
    %12 = arith.index_cast %9 : i32 to index
    %c0_3 = arith.constant 0 : index
    %13 = vector.load %arg3[%12, %c0_3] : memref<16x128xf32, #tpu.memory_space<vmem>>, vector<16x128xf32>
    %c16_i32_4 = arith.constant 16 : i32
    %14 = arith.muli %c0_i32_1, %c16_i32_4 : i32
    %15 = arith.addi %5, %14 : i32
    %16 = vector.broadcast %15 : i32 to vector<16x128xi32>
    %17 = arith.addi %16, %6 : vector<16x128xi32>
    %c16_i32_5 = arith.constant 16 : i32
    %18 = vector.broadcast %c16_i32_5 : i32 to vector<16x128xi32>
    %19 = arith.cmpi slt, %17, %18 : vector<16x128xi32>
    %cst_6 = arith.constant 0.000000e+00 : f32
    %20 = vector.broadcast %cst_6 : f32 to vector<16x128xf32>
    %21 = arith.cmpf ogt, %11, %20 : vector<16x128xf32>
    %22 = arith.andi %21, %19 : vector<16x128xi1>
    %23 = arith.extui %22 : vector<16x128xi1> to vector<16x128xi32>
    %24 = arith.sitofp %23 : vector<16x128xi32> to vector<16x128xf32>
    %cst_7 = arith.constant 0.000000e+00 : f32
    %25 = vector.broadcast %cst_7 : f32 to vector<16x128xf32>
    %26 = arith.select %22, %13, %25 : vector<16x128xi1>, vector<16x128xf32>
    %27 = arith.addf %24, %13 : vector<16x128xf32>
    %cst_8 = arith.constant 0.000000e+00 : f32
    %28 = vector.broadcast %cst_8 : f32 to vector<16x128xf32>
    %29 = arith.select %19, %27, %28 : vector<16x128xi1>, vector<16x128xf32>
    %30 = vector.shape_cast %26 : vector<16x128xf32> to vector<2x8x128xf32>
    %cst_9 = arith.constant dense<0.000000e+00> : vector<8x128xf32>
    %31 = vector.multi_reduction <add>, %30, %cst_9 [0] : vector<2x8x128xf32> to vector<8x128xf32>
    %32 = arith.addf %7, %31 : vector<8x128xf32>
    %33 = vector.shape_cast %29 : vector<16x128xf32> to vector<2x8x128xf32>
    %cst_10 = arith.constant dense<0.000000e+00> : vector<8x128xf32>
    %34 = vector.multi_reduction <add>, %33, %cst_10 [0] : vector<2x8x128xf32> to vector<8x128xf32>
    %35 = arith.addf %7, %34 : vector<8x128xf32>
    %c1_i32_11 = arith.constant 1 : i32
    %c0_12 = arith.constant 0 : index
    %c0_13 = arith.constant 0 : index
    %c0_14 = arith.constant 0 : index
    %36 = vector.load %arg4[%c0_12, %c0_13, %c0_14] : memref<1x8x128xf32, #tpu.memory_space<vmem>>, vector<1x8x128xf32>
    %37 = vector.shape_cast %32 : vector<8x128xf32> to vector<1x8x128xf32>
    %38 = arith.addf %36, %37 : vector<1x8x128xf32>
    %c0_15 = arith.constant 0 : index
    %c0_16 = arith.constant 0 : index
    %c0_17 = arith.constant 0 : index
    %39 = vector.load %arg4[%c0_15, %c0_16, %c0_17] : memref<1x8x128xf32, #tpu.memory_space<vmem>>, vector<1x8x128xf32>
    tpu.vector_store %arg4[%c0_15, %c0_16, %c0_17], %38 {strides = array<i32>} : memref<1x8x128xf32, #tpu.memory_space<vmem>>, vector<1x8x128xf32>,
    %c0_18 = arith.constant 0 : index
    %c0_19 = arith.constant 0 : index
    %c0_20 = arith.constant 0 : index
    %40 = vector.load %arg5[%c0_18, %c0_19, %c0_20] : memref<1x8x128xf32, #tpu.memory_space<vmem>>, vector<1x8x128xf32>
    %41 = vector.shape_cast %35 : vector<8x128xf32> to vector<1x8x128xf32>
    %42 = arith.addf %40, %41 : vector<1x8x128xf32>
    %c0_21 = arith.constant 0 : index
    %c0_22 = arith.constant 0 : index
    %c0_23 = arith.constant 0 : index
    %43 = vector.load %arg5[%c0_21, %c0_22, %c0_23] : memref<1x8x128xf32, #tpu.memory_space<vmem>>, vector<1x8x128xf32>
    tpu.vector_store %arg5[%c0_21, %c0_22, %c0_23], %42 {strides = array<i32>} : memref<1x8x128xf32, #tpu.memory_space<vmem>>, vector<1x8x128xf32>,
    return
  }
  func.func @transform_0(%arg0: i32, %arg1: i32) -> (i32, i32) {
    %c1_i32 = arith.constant 1 : i32
    %0 = arith.muli %arg0, %c1_i32 : i32
    %1 = arith.addi %0, %arg1 : i32
    %c0_i32 = arith.constant 0 : i32
    %2 = arith.minsi %1, %c0_i32 : i32
    %c0_i32_0 = arith.constant 0 : i32
    %c0_i32_1 = arith.constant 0 : i32
    return %2, %c0_i32_0 : i32, i32
  }
  func.func @transform_1(%arg0: i32, %arg1: i32) -> (i32, i32) {
    %c1_i32 = arith.constant 1 : i32
    %0 = arith.muli %arg0, %c1_i32 : i32
    %1 = arith.addi %0, %arg1 : i32
    %c0_i32 = arith.constant 0 : i32
    %2 = arith.minsi %1, %c0_i32 : i32
    %c0_i32_0 = arith.constant 0 : i32
    %c0_i32_1 = arith.constant 0 : i32
    return %2, %c0_i32_0 : i32, i32
  }
  func.func @transform_2(%arg0: i32, %arg1: i32) -> (i32, i32, i32) {
    %c0_i32 = arith.constant 0 : i32
    %c0_i32_0 = arith.constant 0 : i32
    %c0_i32_1 = arith.constant 0 : i32
    return %arg0, %c0_i32, %c0_i32_0 : i32, i32, i32
  }
  func.func @transform_3(%arg0: i32, %arg1: i32) -> (i32, i32, i32) {
    %c0_i32 = arith.constant 0 : i32
    %c0_i32_0 = arith.constant 0 : i32
    %c0_i32_1 = arith.constant 0 : i32
    return %arg0, %c0_i32, %c0_i32_0 : i32, i32, i32
  }
}

</mosaic_0001>

<llo_original>
// kernel: tpu_custom_call.1
$region0: #{tpu_custom_call.1}
  #allocation0 [shape = 'u32[]', space=smem, size = 0x4, offset = 0x4, fixed_abs, tag = 'smem constant byte address 0x4 - core index']
  #allocation1 [shape = 'u32[72,128]{1,0:T(1,128)}', space=vmem, size = 0x9000, scoped, tag = 'internal scratch']
  %s0 = inlined_call_operand.hbm [shape: f32[16,128], index: 0, kind: input, shape index: {}]
  %s1 = inlined_call_operand.hbm [shape: f32[16,128], index: 1, kind: input, shape index: {}]
  %s2 = inlined_call_operand.hbm [shape: f32[1,8,128], index: 2, kind: output, shape index: {0}]
  %s3 = inlined_call_operand.hbm [shape: f32[1,8,128], index: 3, kind: output, shape index: {1}]
  %4 = xla_tuple %s2, %s3
  %s5 = sld [smem:[#allocation0]]
  $region38: #{tpu_custom_call.1} parent=0
    _
  %s7 = ssub.s32 1, %s5
  %s8 = scalar_select 0, %s7, %s5
  $region1: #{tpu_custom_call.1} parent=0
    #allocation2 [shape = 'u8[8192]{0}', space=vmem, size = 0x2000, scoped, tag = 'input window, operand 0, single buffered']
    #allocation3 [shape = 's32[1]{0}', space=sflag, size = 0x4, scoped, tag = 'scoped memory for tpu_custom_call.1']
    #allocation4 [shape = 's32[1]{0}', space=sflag, size = 0x4, scoped, tag = 'scoped memory for tpu_custom_call.1']
    #allocation5 [shape = 'u8[8192]{0}', space=vmem, size = 0x2000, scoped, tag = 'input window, operand 1, single buffered']
    #allocation6 [shape = 's32[1]{0}', space=sflag, size = 0x4, scoped, tag = 'scoped memory for tpu_custom_call.1']
    #allocation7 [shape = 'u8[4096]{0}', space=vmem, size = 0x1000, scoped, tag = 'output window, operand 0, single buffered']
    #allocation8 [shape = 'u8[4096]{0}', space=vmem, size = 0x1000, scoped, tag = 'output window, operand 1, single buffered']
    #allocation9 [shape = 's32[1]{0}', space=sflag, size = 0x4, scoped, tag = 'scoped memory for tpu_custom_call.1']
    %9 = vsyncpa [#allocation3], 0
    %10 = vsyncpa [#allocation6], 0
    %11 = vsyncpa [#allocation4], 0
    %12 = vsyncpa [#allocation9], 0
    // Predicated region
    $region2: #{tpu_custom_call.1} parent=1 // pred_check
      _
    $region3: #{tpu_custom_call.1} parent=1 // pred_check_branch
      %14 = sbr.rel (0) target = $region5
    $region4: #{tpu_custom_call.1} parent=1 // pred_region
      %s15 = sadd.s32 0, 0
      %p16 = scmp.lt.s32.totalorder %s15, 0
      %s17 = scalar_select %p16, %s15, 0
      %s18 = smul.u32 2, %s17
      %20 = vsyncadd [#allocation3], 0
      %s21 = smul.addr %s18, 8
      %s22 = scalar_lea.hbm %s0, %s21
      %s23 = sshll.u32 %s22, 4
      %s24 = int_to_ptr.hbm [resolvable:$true] %s23
      %s25 = sshll.u32 [#allocation2], 4
      %s26 = int_to_ptr.vmem [resolvable:$true] %s25
      %31 = dma.hbm_to_vmem [thread:$0]  %s24, 256, %s26, [#allocation3], 128, 128, 8
    $region5: #{tpu_custom_call.1} parent=1 // pred_fallthru
      _
    // Predicated region
    $region6: #{tpu_custom_call.1} parent=1 // pred_check
      _
    $region7: #{tpu_custom_call.1} parent=1 // pred_check_branch
      %33 = sbr.rel (0) target = $region9
    $region8: #{tpu_custom_call.1} parent=1 // pred_region
      %s34 = sadd.s32 0, 0
      %p35 = scmp.lt.s32.totalorder %s34, 0
      %s36 = scalar_select %p35, %s34, 0
      %s37 = smul.u32 2, %s36
      %39 = vsyncadd [#allocation6], 0
      %s40 = smul.addr %s37, 8
      %s41 = scalar_lea.hbm %s1, %s40
      %s42 = sshll.u32 %s41, 4
      %s43 = int_to_ptr.hbm [resolvable:$true] %s42
      %s44 = sshll.u32 [#allocation5], 4
      %s45 = int_to_ptr.vmem [resolvable:$true] %s44
      %50 = dma.hbm_to_vmem [thread:$0]  %s43, 256, %s45, [#allocation6], 128, 128, 8
    $region9: #{tpu_custom_call.1} parent=1 // pred_fallthru
      _
    // Predicated region
    $region10: #{tpu_custom_call.1} parent=1 // pred_check
      _
    $region11: #{tpu_custom_call.1} parent=1 // pred_check_branch
      %52 = sbr.rel (0) target = $region13
    $region12: #{tpu_custom_call.1} parent=1 // pred_region
      %54 = dma.done [#allocation3], 256
    $region13: #{tpu_custom_call.1} parent=1 // pred_fallthru
      _
    // Predicated region
    $region14: #{tpu_custom_call.1} parent=1 // pred_check
      _
    $region15: #{tpu_custom_call.1} parent=1 // pred_check_branch
      %56 = sbr.rel (0) target = $region17
    $region16: #{tpu_custom_call.1} parent=1 // pred_region
      %58 = dma.done [#allocation6], 256
    $region17: #{tpu_custom_call.1} parent=1 // pred_fallthru
      _
    %s59 = sadd.s32 0, 0
    %p60 = scmp.lt.s32.totalorder %s59, 0
    %s61 = scalar_select %p60, %s59, 0
    %s62 = smul.u32 2, %s61
    %s63 = sadd.s32 0, 0
    %p64 = scmp.lt.s32.totalorder %s63, 0
    %s65 = scalar_select %p64, %s63, 0
    %s66 = smul.u32 2, %s65
    %p67 = scmp.eq.s32.totalorder 0, 0
    // Predicated region
    $region18: #{tpu_custom_call.1} parent=1 // pred_check
      %p68 = pneg %p67
    $region19: #{tpu_custom_call.1} parent=1 // pred_check_branch
      %70 = sbr.rel (%p68) target = $region21
    $region20: #{tpu_custom_call.1} parent=1 // pred_region
      %71 = vst [vmem:[#allocation7] sm:$0xff] 0.0
      %72 = vst [vmem:[#allocation8] sm:$0xff] 0.0
    $region21: #{tpu_custom_call.1} parent=1 // pred_fallthru
      _
    %s73 = sadd.s32 0, 0
    %s74 = smul.u32 %s73, 16
    %v75 = vlaneseq
    %v76 = vshrl.u32 %v75, 7
    %v77 = vadd.s32 %v76, 8
    %v78 = vld [vmem:[#allocation2] sm:$0xff]
    %v79 = vld [vmem:[#allocation2 + $0x8] sm:$0xff]
    %v80 = vld [vmem:[#allocation5] sm:$0xff]
    %v81 = vld [vmem:[#allocation5 + $0x8] sm:$0xff]
    %v82 = vstv %s74
    %v83 = vadd.s32 %v82, %v76
    %v84 = vadd.s32 %v82, %v77
    %vm85 = vcmp.lt.s32.totalorder %v83, 16
    %vm86 = vcmp.lt.s32.totalorder %v84, 16
    %vm87 = vcmp.gt.f32.partialorder %v78, 0.0
    %vm88 = vcmp.gt.f32.partialorder %v79, 0.0
    %vm89 = vmand %vm87, %vm85
    %vm90 = vmand %vm88, %vm86
    %v91 = vsel %vm89, 1, 0
    %v92 = vsel %vm90, 1, 0
    %v93 = vcvt.s32.f32 %v91
    %v94 = vcvt.s32.f32 %v92
    %v95 = vsel %vm89, %v80, 0.0
    %v96 = vsel %vm90, %v81, 0.0
    %v97 = vadd.f32 %v93, %v80
    %v98 = vadd.f32 %v94, %v81
    %v99 = vsel %vm85, %v97, 0.0
    %v100 = vsel %vm86, %v98, 0.0
    %v101 = vadd.f32 %v95, %v96
    %v102 = vadd.f32 %v101, 0.0
    %v103 = vadd.f32 %v99, %v100
    %v104 = vadd.f32 %v103, 0.0
    %v105 = vld [vmem:[#allocation7] sm:$0xff]
    %v106 = vadd.f32 %v105, %v102
    %107 = vst [vmem:[#allocation7] sm:$0xff] %v106
    %v108 = vld [vmem:[#allocation8] sm:$0xff]
    %v109 = vadd.f32 %v108, %v104
    %110 = vst [vmem:[#allocation8] sm:$0xff] %v109
    // Predicated region
    $region22: #{tpu_custom_call.1} parent=1 // pred_check
      _
    $region23: #{tpu_custom_call.1} parent=1 // pred_check_branch
      %112 = sbr.rel (0) target = $region25
    $region24: #{tpu_custom_call.1} parent=1 // pred_region
      %114 = vsyncadd [#allocation4], 0
      %s116 = sshll.u32 [#allocation7], 4
      %s117 = int_to_ptr.vmem [resolvable:$true] %s116
      %s118 = sshll.u32 %s2, 4
      %s119 = int_to_ptr.hbm [resolvable:$true] %s118
      %121 = dma.vmem_to_hbm [thread:$0]  %s117, 128, %s119, [#allocation4]
    $region25: #{tpu_custom_call.1} parent=1 // pred_fallthru
      _
    // Predicated region
    $region26: #{tpu_custom_call.1} parent=1 // pred_check
      _
    $region27: #{tpu_custom_call.1} parent=1 // pred_check_branch
      %123 = sbr.rel (0) target = $region29
    $region28: #{tpu_custom_call.1} parent=1 // pred_region
      %125 = vsyncadd [#allocation9], 0
      %s127 = sshll.u32 [#allocation8], 4
      %s128 = int_to_ptr.vmem [resolvable:$true] %s127
      %s129 = sshll.u32 %s3, 4
      %s130 = int_to_ptr.hbm [resolvable:$true] %s129
      %132 = dma.vmem_to_hbm [thread:$0]  %s128, 128, %s130, [#allocation9]
    $region29: #{tpu_custom_call.1} parent=1 // pred_fallthru
      _
    // Predicated region
    $region30: #{tpu_custom_call.1} parent=1 // pred_check
      _
    $region31: #{tpu_custom_call.1} parent=1 // pred_check_branch
      %134 = sbr.rel (0) target = $region33
    $region32: #{tpu_custom_call.1} parent=1 // pred_region
      %136 = dma.done [#allocation4], 128
    $region33: #{tpu_custom_call.1} parent=1 // pred_fallthru
      _
    // Predicated region
    $region34: #{tpu_custom_call.1} parent=1 // pred_check
      _
    $region35: #{tpu_custom_call.1} parent=1 // pred_check_branch
      %138 = sbr.rel (0) target = $region37
    $region36: #{tpu_custom_call.1} parent=1 // pred_region
      %140 = dma.done [#allocation9], 128
    $region37: #{tpu_custom_call.1} parent=1 // pred_fallthru
      _
    %141 = vsyncpa [#allocation3], 1
    %142 = vsyncpa [#allocation6], 1
    %143 = vsyncpa [#allocation4], 1
    %144 = vsyncpa [#allocation9], 1

</llo_original>
